<compile_context>
chip_gen: v5e
topology: v5e:2x2
jax: 0.10.0
libtpu: 0.0.40
codegen_flags: <defaults>
</compile_context>

<pallas_src>
import functools
import math

import jax
import jax.numpy as jnp
from jax.experimental import pallas as pl
from jax.experimental.pallas import tpu as pltpu

_LANE = 128      # lane width (last dim alignment)
_SUBLANE = 8     # sublane width (second-to-last dim alignment)


def _round_up(n: int, m: int) -> int:
    return ((n + m - 1) // m) * m


def _activation_fn(name):
    if name == "tanh":
        return jnp.tanh
    if name == "relu":
        return lambda y: jnp.maximum(y, 0.0)
    if name == "sigmoid":
        return jax.nn.sigmoid
    raise ValueError(f"unsupported activation: {name}")


# ---------------------------------------------------------------------------
# Fused kernel: (x @ W0 + b0) -> act -> ... -> (h @ W_{L-1} + b_{L-1})
# refs = (x_ref, w0_ref, b0_ref, ..., w_{L-1}_ref, b_{L-1}_ref, o_ref)
# Weights arrive bf16 (MXU-native); bias/activation math stays f32 (v5e-safe).
# ---------------------------------------------------------------------------
def _fused_mlp_kernel(*refs, n_layers: int, activation: str):
    act = _activation_fn(activation)
    x_ref = refs[0]
    o_ref = refs[-1]

    h = x_ref[...]                                  # bf16 x stream
    for l in range(n_layers):
        w_ref = refs[1 + 2 * l]                     # (Fin_pad, Fout_pad) bf16, pre-transposed
        b_ref = refs[2 + 2 * l]                     # (1, Fout_pad) f32
        y = jnp.dot(h.astype(jnp.bfloat16), w_ref[...],
                    preferred_element_type=jnp.float32)   # bf16 x bf16 -> f32 acc (MXU)
        y = y + b_ref[...]                          # f32 bias add, broadcasts over rows
        if l < n_layers - 1:                        # hidden layers get the activation
            y = act(y)                              # f32; tanh/sigmoid -> EUP slot
        h = y
    o_ref[...] = h.astype(o_ref.dtype)


# ---------------------------------------------------------------------------
# Parameter construction (mirrors PyTorch nn.Linear default init / layer shapes)
# ---------------------------------------------------------------------------
def init_mlp_params(key, input_size, output_size, num_hidden, hidden_sizes,
                    dtype=jnp.float32):
    """Returns a list of (weight (out,in), bias (out,)) per Linear layer."""
    if isinstance(hidden_sizes, int):
        hidden_sizes = [hidden_sizes] * num_hidden
    sizes = [input_size] + list(hidden_sizes[:num_hidden]) + [output_size]
    params = []
    for l in range(len(sizes) - 1):
        fin, fout = sizes[l], sizes[l + 1]
        key, wk, bk = jax.random.split(key, 3)
        bound = 1.0 / math.sqrt(fin)
        w = jax.random.uniform(wk, (fout, fin), dtype, -bound, bound)
        b = jax.random.uniform(bk, (fout,), dtype, -bound, bound)
        params.append((w, b))
    return params


def prepare_mlp_params(params, weights_dtype=jnp.bfloat16):
    """One-time prep: transpose to (Fin, Fout), zero-pad feature dims to 128,
    and cast weights to bf16 (MXU-native).  Biases stay f32 (added in f32)."""
    prepped = []
    for w, b in params:
        fout, fin = w.shape
        fin_p = _round_up(fin, _LANE)
        fout_p = _round_up(fout, _LANE)
        w_t = (jnp.zeros((fin_p, fout_p), jnp.float32)
               .at[:fin, :fout].set(w.astype(jnp.float32).T)
               .astype(weights_dtype))
        b_p = jnp.zeros((1, fout_p), jnp.float32).at[:, :fout].set(
            b.astype(jnp.float32))
        prepped.append((w_t, b_p))
    return prepped


# ---------------------------------------------------------------------------
# Batch-tile selection
# ---------------------------------------------------------------------------
def _choose_tm(batch: int, block_rows: int) -> int:
    """Pick tm: multiple of 8, big enough to fill the MXU, minimal batch padding,
    and >=2 grid steps for large batches (both v7x TensorCores busy)."""
    b8 = _round_up(batch, _SUBLANE)
    if b8 <= block_rows:
        # Single tile covers the batch.  If it is large, split in two so the
        # "parallel" grid axis can feed both TensorCores on v7x (tm stays >=256).
        if b8 >= 512 and (b8 // 2) % _SUBLANE == 0:
            return b8 // 2
        return b8
    candidates = sorted({c for c in (128, 256, 384, 512, block_rows)
                         if 128 <= c <= block_rows and c % _SUBLANE == 0})
    if not candidates:
        return _round_up(min(block_rows, b8), _SUBLANE)
    best_tm, best_cost = None, None
    for t in candidates:
        b_pad = _round_up(batch, t)
        waste = (b_pad - batch) / b_pad          # wasted MXU/EUP work fraction
        steps = b_pad // t
        cost = waste + 0.01 * steps              # small per-grid-step overhead penalty
        if best_cost is None or cost < best_cost - 1e-12 or (
                abs(cost - best_cost) <= 1e-12 and t > best_tm):
            best_tm, best_cost = t, cost
    return best_tm


# ---------------------------------------------------------------------------
# pallas_call builder (single_buffer_weights toggles pl.Buffered(1) on weights)
# ---------------------------------------------------------------------------
def _pallas_mlp_call(x_p, flat_params, *, kernel, grid, tm, fin_p, fout_p,
                     out_dtype, vmem_limit, cost, single_buffer_weights):
    in_specs = [pl.BlockSpec((tm, fin_p), lambda i: (i, 0))]   # streamed over batch
    for arr in flat_params:
        # Constant index_map => stays VMEM-resident across grid steps; single
        # buffering avoids doubling the resident weight footprint.
        if single_buffer_weights:
            spec = pl.BlockSpec(arr.shape, lambda i: (0, 0),
                                pipeline_mode=pl.Buffered(1))
        else:
            spec = pl.BlockSpec(arr.shape, lambda i: (0, 0))
        in_specs.append(spec)

    return pl.pallas_call(
        kernel,
        out_shape=jax.ShapeDtypeStruct((x_p.shape[0], fout_p), out_dtype),
        grid=grid,
        in_specs=in_specs,
        out_specs=pl.BlockSpec((tm, fout_p), lambda i: (i, 0)),
        compiler_params=pltpu.CompilerParams(
            dimension_semantics=("parallel",),
            vmem_limit_bytes=vmem_limit,
        ),
        cost_estimate=cost,
    )(x_p, *flat_params)


# ---------------------------------------------------------------------------
# Forward pass (single fused pallas_call)
# ---------------------------------------------------------------------------
def mlp_forward(x, prepped_params, output_size, *, activation="tanh",
                block_rows=512, out_dtype=None):
    """x: (B, input_size) -> (B, output_size). prepped_params from prepare_mlp_params."""
    B, Fin = x.shape
    n_layers = len(prepped_params)
    fin_p = prepped_params[0][0].shape[0]
    fout_p = prepped_params[-1][0].shape[1]
    out_dtype = x.dtype if out_dtype is None else out_dtype

    tm = _choose_tm(B, block_rows)
    B_pad = _round_up(B, tm)

    # bf16 x stream: halves x HBM traffic; the pad already materializes a copy,
    # and the kernel feeds bf16 to the MXU anyway (no extra precision loss).
    x_p = (jnp.zeros((B_pad, fin_p), jnp.bfloat16)
           .at[:B, :Fin].set(x.astype(jnp.bfloat16)))

    flat_params = []
    for w_t, b in prepped_params:
        flat_params.extend((w_t, b))

    # --- cost estimate (advisory, helps XLA schedule around the custom call) ---
    flops = 0
    transcendentals = 0
    bytes_accessed = (x_p.size * jnp.dtype(x_p.dtype).itemsize
                      + B_pad * fout_p * jnp.dtype(out_dtype).itemsize)
    for l, (w_t, b) in enumerate(prepped_params):
        k, n = w_t.shape
        flops += 2 * B_pad * k * n
        if l < n_layers - 1 and activation in ("tanh", "sigmoid"):
            transcendentals += B_pad * n
        bytes_accessed += (w_t.size * jnp.dtype(w_t.dtype).itemsize
                           + b.size * jnp.dtype(b.dtype).itemsize)
    cost = pl.CostEstimate(flops=int(flops),
                           transcendentals=int(transcendentals),
                           bytes_accessed=int(bytes_accessed))

    # --- explicit VMEM budget: resident params (x2 worst-case buffering) +
    #     double-buffered x/out tiles + f32 intermediate temporaries + headroom ---
    param_bytes = sum(int(a.size) * jnp.dtype(a.dtype).itemsize for a in flat_params)
    max_w = max([fin_p] + [w.shape[1] for w, _ in prepped_params])
    stream_bytes = (2 * tm * fin_p * jnp.dtype(x_p.dtype).itemsize
                    + 2 * tm * fout_p * jnp.dtype(out_dtype).itemsize)
    temp_bytes = 4 * tm * max_w * 4
    needed = 2 * param_bytes + stream_bytes + temp_bytes
    vmem_limit = int(min(100 << 20, max(32 << 20, int(needed * 1.25) + (4 << 20))))

    kernel = functools.partial(_fused_mlp_kernel, n_layers=n_layers,
                               activation=activation)
    call = functools.partial(
        _pallas_mlp_call, x_p, flat_params, kernel=kernel, grid=(B_pad // tm,),
        tm=tm, fin_p=fin_p, fout_p=fout_p, out_dtype=out_dtype,
        vmem_limit=vmem_limit, cost=cost)

    try:
        out_p = call(single_buffer_weights=True)
    except Exception:
        # This jax version rejects pl.Buffered(1) on a top-level BlockSpec:
        # fall back to default (double) buffering — correctness unchanged.
        out_p = call(single_buffer_weights=False)

    return out_p[:B, :output_size]


# ---------------------------------------------------------------------------
# Pure-JAX references (unpadded, PyTorch layout) for correctness checking
# ---------------------------------------------------------------------------
def mlp_reference_f32(x, params, activation="tanh"):
    act = _activation_fn(activation)
    n_layers = len(params)
    out = x.astype(jnp.float32)
    for l, (w, b) in enumerate(params):
        out = out @ w.T + b
        if l < n_layers - 1:
            out = act(out)
    return out


def mlp_reference_mixed(x, params, activation="tanh"):
    """Same mixed precision as the kernel: bf16 matmul operands, f32 accumulate."""
    act = _activation_fn(activation)
    n_layers = len(params)
    h = x
    for l, (w, b) in enumerate(params):
        y = jnp.dot(h.astype(jnp.bfloat16), w.T.astype(jnp.bfloat16),
                    preferred_element_type=jnp.float32)
        y = y + b.astype(jnp.float32)
        if l < n_layers - 1:
            y = act(y)
        h = y
    return h


if __name__ == "__main__":
    # Small, MLP-consistent shapes: batch=8, input_size=16, 2 hidden layers of 32, output=8.
    key = jax.random.PRNGKey(0)
    key, xk = jax.random.split(key)

    input_size, output_size, num_hidden, hidden_sizes = 16, 8, 2, 32
    batch = 8

    params = init_mlp_params(key, input_size, output_size, num_hidden, hidden_sizes)
    prepped = prepare_mlp_params(params)     # one-time transpose + pad + bf16 cast
    x = jax.random.normal(xk, (batch, input_size), jnp.float32)

    out = mlp_forward(x, prepped, output_size, activation="tanh")
    out = jax.block_until_ready(out)

    ref_mixed = mlp_reference_mixed(x, params, activation="tanh")
    ref_f32 = mlp_reference_f32(x, params, activation="tanh")

    assert out.shape == (batch, output_size)
    assert jnp.allclose(out.astype(jnp.float32), ref_mixed, atol=1e-4, rtol=1e-4), \
        "Pallas output mismatch vs mixed-precision reference"
    assert jnp.allclose(out.astype(jnp.float32), ref_f32, atol=5e-2, rtol=5e-2), \
        "Pallas output grossly off vs f32 reference"

    print("KERNEL_OK")
</pallas_src>

<mosaic_0001>
module attributes {stable_mosaic.version = 11 : i64} {
  func.func @_fused_mlp_kernel(%arg0: i32, %arg1: memref<8x128xbf16, #tpu.memory_space<vmem>>, %arg2: memref<128x128xbf16, #tpu.memory_space<vmem>>, %arg3: memref<1x128xf32, #tpu.memory_space<vmem>>, %arg4: memref<128x128xbf16, #tpu.memory_space<vmem>>, %arg5: memref<1x128xf32, #tpu.memory_space<vmem>>, %arg6: memref<128x128xbf16, #tpu.memory_space<vmem>>, %arg7: memref<1x128xf32, #tpu.memory_space<vmem>>, %arg8: memref<8x128xf32, #tpu.memory_space<vmem>>) attributes {dimension_semantics = [#tpu.dimension_semantics<parallel>], iteration_bounds = array<i64: 1>, scalar_prefetch = 0 : i64, scratch_operands = 0 : i64, tpu.core_type = #tpu.core_type<tc>, window_params = [{transform_indices = @transform_0, window_bounds = array<i64: 8, 128>}, {pipeline_mode = #tpu.pipeline_mode<synchronous>, transform_indices = @transform_1, window_bounds = array<i64: 128, 128>}, {pipeline_mode = #tpu.pipeline_mode<synchronous>, transform_indices = @transform_2, window_bounds = array<i64: 1, 128>}, {pipeline_mode = #tpu.pipeline_mode<synchronous>, transform_indices = @transform_3, window_bounds = array<i64: 128, 128>}, {pipeline_mode = #tpu.pipeline_mode<synchronous>, transform_indices = @transform_4, window_bounds = array<i64: 1, 128>}, {pipeline_mode = #tpu.pipeline_mode<synchronous>, transform_indices = @transform_5, window_bounds = array<i64: 128, 128>}, {pipeline_mode = #tpu.pipeline_mode<synchronous>, transform_indices = @transform_6, window_bounds = array<i64: 1, 128>}, {transform_indices = @transform_7, window_bounds = array<i64: 8, 128>}]} {
    %c0 = arith.constant 0 : index
    %c0_0 = arith.constant 0 : index
    %0 = vector.load %arg1[%c0, %c0_0] : memref<8x128xbf16, #tpu.memory_space<vmem>>, vector<8x128xbf16>
    %c0_1 = arith.constant 0 : index
    %c0_2 = arith.constant 0 : index
    %1 = vector.load %arg2[%c0_1, %c0_2] : memref<128x128xbf16, #tpu.memory_space<vmem>>, vector<128x128xbf16>
    %cst = arith.constant dense<0.000000e+00> : vector<8x128xf32>
    %2 = tpu.matmul %0, %1, %cst {dimension_numbers = #tpu.dot_dimension_numbers<[1], [0], [0], [1], [0, 0, 1, 1], [], []>} : vector<8x128xbf16>, vector<128x128xbf16>, vector<8x128xf32> -> vector<8x128xf32>
    %c0_3 = arith.constant 0 : index
    %c0_4 = arith.constant 0 : index
    %3 = vector.load %arg3[%c0_3, %c0_4] : memref<1x128xf32, #tpu.memory_space<vmem>>, vector<1x128xf32>
    %4 = vector.broadcast %3 : vector<1x128xf32> to vector<8x128xf32>
    %5 = arith.addf %2, %4 : vector<8x128xf32>
    %6 = math.tanh %5 : vector<8x128xf32>
    %7 = arith.truncf %6 : vector<8x128xf32> to vector<8x128xbf16>
    %c0_5 = arith.constant 0 : index
    %c0_6 = arith.constant 0 : index
    %8 = vector.load %arg4[%c0_5, %c0_6] : memref<128x128xbf16, #tpu.memory_space<vmem>>, vector<128x128xbf16>
    %cst_7 = arith.constant dense<0.000000e+00> : vector<8x128xf32>
    %9 = tpu.matmul %7, %8, %cst_7 {dimension_numbers = #tpu.dot_dimension_numbers<[1], [0], [0], [1], [0, 0, 1, 1], [], []>} : vector<8x128xbf16>, vector<128x128xbf16>, vector<8x128xf32> -> vector<8x128xf32>
    %c0_8 = arith.constant 0 : index
    %c0_9 = arith.constant 0 : index
    %10 = vector.load %arg5[%c0_8, %c0_9] : memref<1x128xf32, #tpu.memory_space<vmem>>, vector<1x128xf32>
    %11 = vector.broadcast %10 : vector<1x128xf32> to vector<8x128xf32>
    %12 = arith.addf %9, %11 : vector<8x128xf32>
    %13 = math.tanh %12 : vector<8x128xf32>
    %14 = arith.truncf %13 : vector<8x128xf32> to vector<8x128xbf16>
    %c0_10 = arith.constant 0 : index
    %c0_11 = arith.constant 0 : index
    %15 = vector.load %arg6[%c0_10, %c0_11] : memref<128x128xbf16, #tpu.memory_space<vmem>>, vector<128x128xbf16>
    %cst_12 = arith.constant dense<0.000000e+00> : vector<8x128xf32>
    %16 = tpu.matmul %14, %15, %cst_12 {dimension_numbers = #tpu.dot_dimension_numbers<[1], [0], [0], [1], [0, 0, 1, 1], [], []>} : vector<8x128xbf16>, vector<128x128xbf16>, vector<8x128xf32> -> vector<8x128xf32>
    %c0_13 = arith.constant 0 : index
    %c0_14 = arith.constant 0 : index
    %17 = vector.load %arg7[%c0_13, %c0_14] : memref<1x128xf32, #tpu.memory_space<vmem>>, vector<1x128xf32>
    %18 = vector.broadcast %17 : vector<1x128xf32> to vector<8x128xf32>
    %19 = arith.addf %16, %18 : vector<8x128xf32>
    %c0_15 = arith.constant 0 : index
    %c0_16 = arith.constant 0 : index
    %20 = vector.load %arg8[%c0_15, %c0_16] : memref<8x128xf32, #tpu.memory_space<vmem>>, vector<8x128xf32>
    tpu.vector_store %arg8[%c0_15, %c0_16], %19 {strides = array<i32>} : memref<8x128xf32, #tpu.memory_space<vmem>>, vector<8x128xf32>,
    return
  }
  func.func @transform_0(%arg0: i32) -> (i32, i32) {
    %c0_i32 = arith.constant 0 : i32
    %c0_i32_0 = arith.constant 0 : i32
    return %arg0, %c0_i32 : i32, i32
  }
  func.func @transform_1(%arg0: i32) -> (i32, i32) {
    %c0_i32 = arith.constant 0 : i32
    %c0_i32_0 = arith.constant 0 : i32
    %c0_i32_1 = arith.constant 0 : i32
    return %c0_i32, %c0_i32_0 : i32, i32
  }
  func.func @transform_2(%arg0: i32) -> (i32, i32) {
    %c0_i32 = arith.constant 0 : i32
    %c0_i32_0 = arith.constant 0 : i32
    %c0_i32_1 = arith.constant 0 : i32
    return %c0_i32, %c0_i32_0 : i32, i32
  }
  func.func @transform_3(%arg0: i32) -> (i32, i32) {
    %c0_i32 = arith.constant 0 : i32
    %c0_i32_0 = arith.constant 0 : i32
    %c0_i32_1 = arith.constant 0 : i32
    return %c0_i32, %c0_i32_0 : i32, i32
  }
  func.func @transform_4(%arg0: i32) -> (i32, i32) {
    %c0_i32 = arith.constant 0 : i32
    %c0_i32_0 = arith.constant 0 : i32
    %c0_i32_1 = arith.constant 0 : i32
    return %c0_i32, %c0_i32_0 : i32, i32
  }
  func.func @transform_5(%arg0: i32) -> (i32, i32) {
    %c0_i32 = arith.constant 0 : i32
    %c0_i32_0 = arith.constant 0 : i32
    %c0_i32_1 = arith.constant 0 : i32
    return %c0_i32, %c0_i32_0 : i32, i32
  }
  func.func @transform_6(%arg0: i32) -> (i32, i32) {
    %c0_i32 = arith.constant 0 : i32
    %c0_i32_0 = arith.constant 0 : i32
    %c0_i32_1 = arith.constant 0 : i32
    return %c0_i32, %c0_i32_0 : i32, i32
  }
  func.func @transform_7(%arg0: i32) -> (i32, i32) {
    %c0_i32 = arith.constant 0 : i32
    %c0_i32_0 = arith.constant 0 : i32
    return %arg0, %c0_i32 : i32, i32
  }
}

module attributes {stable_mosaic.version = 11 : i64} {
  func.func @_fused_mlp_kernel(%arg0: i32, %arg1: memref<8x128xbf16, #tpu.memory_space<vmem>>, %arg2: memref<128x128xbf16, #tpu.memory_space<vmem>>, %arg3: memref<1x128xf32, #tpu.memory_space<vmem>>, %arg4: memref<128x128xbf16, #tpu.memory_space<vmem>>, %arg5: memref<1x128xf32, #tpu.memory_space<vmem>>, %arg6: memref<128x128xbf16, #tpu.memory_space<vmem>>, %arg7: memref<1x128xf32, #tpu.memory_space<vmem>>, %arg8: memref<8x128xf32, #tpu.memory_space<vmem>>) attributes {dimension_semantics = [#tpu.dimension_semantics<parallel>], iteration_bounds = array<i64: 1>, scalar_prefetch = 0 : i64, scratch_operands = 0 : i64, tpu.core_type = #tpu.core_type<tc>, window_params = [{transform_indices = @transform_0, window_bounds = array<i64: 8, 128>}, {pipeline_mode = #tpu.pipeline_mode<synchronous>, transform_indices = @transform_1, window_bounds = array<i64: 128, 128>}, {pipeline_mode = #tpu.pipeline_mode<synchronous>, transform_indices = @transform_2, window_bounds = array<i64: 1, 128>}, {pipeline_mode = #tpu.pipeline_mode<synchronous>, transform_indices = @transform_3, window_bounds = array<i64: 128, 128>}, {pipeline_mode = #tpu.pipeline_mode<synchronous>, transform_indices = @transform_4, window_bounds = array<i64: 1, 128>}, {pipeline_mode = #tpu.pipeline_mode<synchronous>, transform_indices = @transform_5, window_bounds = array<i64: 128, 128>}, {pipeline_mode = #tpu.pipeline_mode<synchronous>, transform_indices = @transform_6, window_bounds = array<i64: 1, 128>}, {transform_indices = @transform_7, window_bounds = array<i64: 8, 128>}]} {
    %c0 = arith.constant 0 : index
    %c0_0 = arith.constant 0 : index
    %0 = vector.load %arg1[%c0, %c0_0] : memref<8x128xbf16, #tpu.memory_space<vmem>>, vector<8x128xbf16>
    %c0_1 = arith.constant 0 : index
    %c0_2 = arith.constant 0 : index
    %1 = vector.load %arg2[%c0_1, %c0_2] : memref<128x128xbf16, #tpu.memory_space<vmem>>, vector<128x128xbf16>
    %cst = arith.constant dense<0.000000e+00> : vector<8x128xf32>
    %2 = tpu.matmul %0, %1, %cst {dimension_numbers = #tpu.dot_dimension_numbers<[1], [0], [0], [1], [0, 0, 1, 1], [], []>} : vector<8x128xbf16>, vector<128x128xbf16>, vector<8x128xf32> -> vector<8x128xf32>
    %c0_3 = arith.constant 0 : index
    %c0_4 = arith.constant 0 : index
    %3 = vector.load %arg3[%c0_3, %c0_4] : memref<1x128xf32, #tpu.memory_space<vmem>>, vector<1x128xf32>
    %4 = vector.broadcast %3 : vector<1x128xf32> to vector<8x128xf32>
    %5 = arith.addf %2, %4 : vector<8x128xf32>
    %6 = math.tanh %5 : vector<8x128xf32>
    %7 = arith.truncf %6 : vector<8x128xf32> to vector<8x128xbf16>
    %c0_5 = arith.constant 0 : index
    %c0_6 = arith.constant 0 : index
    %8 = vector.load %arg4[%c0_5, %c0_6] : memref<128x128xbf16, #tpu.memory_space<vmem>>, vector<128x128xbf16>
    %cst_7 = arith.constant dense<0.000000e+00> : vector<8x128xf32>
    %9 = tpu.matmul %7, %8, %cst_7 {dimension_numbers = #tpu.dot_dimension_numbers<[1], [0], [0], [1], [0, 0, 1, 1], [], []>} : vector<8x128xbf16>, vector<128x128xbf16>, vector<8x128xf32> -> vector<8x128xf32>
    %c0_8 = arith.constant 0 : index
    %c0_9 = arith.constant 0 : index
    %10 = vector.load %arg5[%c0_8, %c0_9] : memref<1x128xf32, #tpu.memory_space<vmem>>, vector<1x128xf32>
    %11 = vector.broadcast %10 : vector<1x128xf32> to vector<8x128xf32>
    %12 = arith.addf %9, %11 : vector<8x128xf32>
    %13 = math.tanh %12 : vector<8x128xf32>
    %14 = arith.truncf %13 : vector<8x128xf32> to vector<8x128xbf16>
    %c0_10 = arith.constant 0 : index
    %c0_11 = arith.constant 0 : index
    %15 = vector.load %arg6[%c0_10, %c0_11] : memref<128x128xbf16, #tpu.memory_space<vmem>>, vector<128x128xbf16>
    %cst_12 = arith.constant dense<0.000000e+00> : vector<8x128xf32>
    %16 = tpu.matmul %14, %15, %cst_12 {dimension_numbers = #tpu.dot_dimension_numbers<[1], [0], [0], [1], [0, 0, 1, 1], [], []>} : vector<8x128xbf16>, vector<128x128xbf16>, vector<8x128xf32> -> vector<8x128xf32>
    %c0_13 = arith.constant 0 : index
    %c0_14 = arith.constant 0 : index
    %17 = vector.load %arg7[%c0_13, %c0_14] : memref<1x128xf32, #tpu.memory_space<vmem>>, vector<1x128xf32>
    %18 = vector.broadcast %17 : vector<1x128xf32> to vector<8x128xf32>
    %19 = arith.addf %16, %18 : vector<8x128xf32>
    %c0_15 = arith.constant 0 : index
    %c0_16 = arith.constant 0 : index
    %20 = vector.load %arg8[%c0_15, %c0_16] : memref<8x128xf32, #tpu.memory_space<vmem>>, vector<8x128xf32>
    tpu.vector_store %arg8[%c0_15, %c0_16], %19 {strides = array<i32>} : memref<8x128xf32, #tpu.memory_space<vmem>>, vector<8x128xf32>,
    return
  }
  func.func @transform_0(%arg0: i32) -> (i32, i32) {
    %c0_i32 = arith.constant 0 : i32
    %c0_i32_0 = arith.constant 0 : i32
    return %arg0, %c0_i32 : i32, i32
  }
  func.func @transform_1(%arg0: i32) -> (i32, i32) {
    %c0_i32 = arith.constant 0 : i32
    %c0_i32_0 = arith.constant 0 : i32
    %c0_i32_1 = arith.constant 0 : i32
    return %c0_i32, %c0_i32_0 : i32, i32
  }
  func.func @transform_2(%arg0: i32) -> (i32, i32) {
    %c0_i32 = arith.constant 0 : i32
    %c0_i32_0 = arith.constant 0 : i32
    %c0_i32_1 = arith.constant 0 : i32
    return %c0_i32, %c0_i32_0 : i32, i32
  }
  func.func @transform_3(%arg0: i32) -> (i32, i32) {
    %c0_i32 = arith.constant 0 : i32
    %c0_i32_0 = arith.constant 0 : i32
    %c0_i32_1 = arith.constant 0 : i32
    return %c0_i32, %c0_i32_0 : i32, i32
  }
  func.func @transform_4(%arg0: i32) -> (i32, i32) {
    %c0_i32 = arith.constant 0 : i32
    %c0_i32_0 = arith.constant 0 : i32
    %c0_i32_1 = arith.constant 0 : i32
    return %c0_i32, %c0_i32_0 : i32, i32
  }
  func.func @transform_5(%arg0: i32) -> (i32, i32) {
    %c0_i32 = arith.constant 0 : i32
    %c0_i32_0 = arith.constant 0 : i32
    %c0_i32_1 = arith.constant 0 : i32
    return %c0_i32, %c0_i32_0 : i32, i32
  }
  func.func @transform_6(%arg0: i32) -> (i32, i32) {
    %c0_i32 = arith.constant 0 : i32
    %c0_i32_0 = arith.constant 0 : i32
    %c0_i32_1 = arith.constant 0 : i32
    return %c0_i32, %c0_i32_0 : i32, i32
  }
  func.func @transform_7(%arg0: i32) -> (i32, i32) {
    %c0_i32 = arith.constant 0 : i32
    %c0_i32_0 = arith.constant 0 : i32
    return %arg0, %c0_i32 : i32, i32
  }
}

</mosaic_0001>

<llo_original>
// kernel: tpu_custom_call.1
$region0: #{tpu_custom_call.1}
  #allocation0 [shape = 'u32[]', space=smem, size = 0x4, offset = 0x4, fixed_abs, tag = 'smem constant byte address 0x4 - core index']
  #allocation1 [shape = 'u32[72,128]{1,0:T(1,128)}', space=vmem, size = 0x9000, scoped, tag = 'internal scratch']
  %s0 = inlined_call_operand.hbm [shape: bf16[8,128], index: 0, kind: input, shape index: {}]
  %s1 = inlined_call_operand.hbm [shape: bf16[128,128], index: 1, kind: input, shape index: {}]
  %s2 = inlined_call_operand.vmem [shape: f32[1,128], index: 2, kind: input, shape index: {}]
  %s3 = inlined_call_operand.hbm [shape: bf16[128,128], index: 3, kind: input, shape index: {}]
  %s4 = inlined_call_operand.vmem [shape: f32[1,128], index: 4, kind: input, shape index: {}]
  %s5 = inlined_call_operand.hbm [shape: bf16[128,128], index: 5, kind: input, shape index: {}]
  %s6 = inlined_call_operand.vmem [shape: f32[1,128], index: 6, kind: input, shape index: {}]
  %s7 = inlined_call_operand.hbm [shape: f32[8,128], index: 7, kind: output, shape index: {}]
  %s8 = sld [smem:[#allocation0]]
  $region54: #{tpu_custom_call.1} parent=0
    _
  %s10 = ssub.s32 1, %s8
  %s11 = scalar_select 0, %s10, %s8
  $region1: #{tpu_custom_call.1} parent=0
    #allocation2 [shape = 'u8[2048]{0}', space=vmem, size = 0x800, scoped, tag = 'input window, operand 0, single buffered']
    #allocation3 [shape = 's32[1]{0}', space=sflag, size = 0x4, scoped, tag = 'scoped memory for tpu_custom_call.1']
    #allocation4 [shape = 's32[1]{0}', space=sflag, size = 0x4, scoped, tag = 'scoped memory for tpu_custom_call.1']
    #allocation5 [shape = 'u8[32768]{0}', space=vmem, size = 0x8000, scoped, tag = 'input window, operand 1, single buffered']
    #allocation6 [shape = 's32[1]{0}', space=sflag, size = 0x4, scoped, tag = 'scoped memory for tpu_custom_call.1']
    #allocation7 [shape = 'u8[32768]{0}', space=vmem, size = 0x8000, scoped, tag = 'input window, operand 3, single buffered']
    #allocation8 [shape = 'u8[32768]{0}', space=vmem, size = 0x8000, scoped, tag = 'input window, operand 5, single buffered']
    #allocation9 [shape = 's32[1]{0}', space=sflag, size = 0x4, scoped, tag = 'scoped memory for tpu_custom_call.1']
    #allocation10 [shape = 'u8[4096]{0}', space=vmem, size = 0x1000, scoped, tag = 'output window, operand 0, single buffered']
    %12 = vsyncpa [#allocation3], 0
    %13 = vsyncpa [#allocation6], 0
    %14 = vsyncpa [#allocation9], 0
    %15 = vsyncpa [#allocation4], 0
    // Predicated region
    $region2: #{tpu_custom_call.1} parent=1 // pred_check
      _
    $region3: #{tpu_custom_call.1} parent=1 // pred_check_branch
      %17 = sbr.rel (0) target = $region5
    $region4: #{tpu_custom_call.1} parent=1 // pred_region
      %19 = vsyncadd [#allocation3], 0
      %s21 = sshll.u32 %s0, 4
      %s22 = int_to_ptr.hbm [resolvable:$true] %s21
      %s23 = sshll.u32 [#allocation2], 4
      %s24 = int_to_ptr.vmem [resolvable:$true] %s23
      %26 = dma.hbm_to_vmem [thread:$0]  %s22, 64, %s24, [#allocation3]
    $region5: #{tpu_custom_call.1} parent=1 // pred_fallthru
      _
    // Predicated region
    $region6: #{tpu_custom_call.1} parent=1 // pred_check
      _
    $region7: #{tpu_custom_call.1} parent=1 // pred_check_branch
      %28 = sbr.rel (0) target = $region9
    $region8: #{tpu_custom_call.1} parent=1 // pred_region
      %30 = vsyncadd [#allocation6], 0
      %s31 = sshll.u32 %s1, 4
      %s32 = int_to_ptr.hbm [resolvable:$true] %s31
      %s33 = sshll.u32 [#allocation5], 4
      %s34 = int_to_ptr.vmem [resolvable:$true] %s33
      %39 = dma.hbm_to_vmem [thread:$0]  %s32, 1024, %s34, [#allocation6], 64, 64, 4
    $region9: #{tpu_custom_call.1} parent=1 // pred_fallthru
      _
    // Predicated region
    $region10: #{tpu_custom_call.1} parent=1 // pred_check
      _
    $region11: #{tpu_custom_call.1} parent=1 // pred_check_branch
      %41 = sbr.rel (0) target = $region13
    $region12: #{tpu_custom_call.1} parent=1 // pred_region
      _
    $region13: #{tpu_custom_call.1} parent=1 // pred_fallthru
      _
    // Predicated region
    $region14: #{tpu_custom_call.1} parent=1 // pred_check
      _
    $region15: #{tpu_custom_call.1} parent=1 // pred_check_branch
      %43 = sbr.rel (0) target = $region17
    $region16: #{tpu_custom_call.1} parent=1 // pred_region
      %45 = vsyncadd [#allocation6], 0
      %s46 = sshll.u32 %s3, 4
      %s47 = int_to_ptr.hbm [resolvable:$true] %s46
      %s48 = sshll.u32 [#allocation7], 4
      %s49 = int_to_ptr.vmem [resolvable:$true] %s48
      %54 = dma.hbm_to_vmem [thread:$0]  %s47, 1024, %s49, [#allocation6], 64, 64, 4
    $region17: #{tpu_custom_call.1} parent=1 // pred_fallthru
      _
    // Predicated region
    $region18: #{tpu_custom_call.1} parent=1 // pred_check
      _
    $region19: #{tpu_custom_call.1} parent=1 // pred_check_branch
      %56 = sbr.rel (0) target = $region21
    $region20: #{tpu_custom_call.1} parent=1 // pred_region
      _
    $region21: #{tpu_custom_call.1} parent=1 // pred_fallthru
      _
    // Predicated region
    $region22: #{tpu_custom_call.1} parent=1 // pred_check
      _
    $region23: #{tpu_custom_call.1} parent=1 // pred_check_branch
      %58 = sbr.rel (0) target = $region25
    $region24: #{tpu_custom_call.1} parent=1 // pred_region
      %60 = vsyncadd [#allocation9], 0
      %s61 = sshll.u32 %s5, 4
      %s62 = int_to_ptr.hbm [resolvable:$true] %s61
      %s63 = sshll.u32 [#allocation8], 4
      %s64 = int_to_ptr.vmem [resolvable:$true] %s63
      %69 = dma.hbm_to_vmem [thread:$0]  %s62, 1024, %s64, [#allocation9], 64, 64, 4
    $region25: #{tpu_custom_call.1} parent=1 // pred_fallthru
      _
    // Predicated region
    $region26: #{tpu_custom_call.1} parent=1 // pred_check
      _
    $region27: #{tpu_custom_call.1} parent=1 // pred_check_branch
      %71 = sbr.rel (0) target = $region29
    $region28: #{tpu_custom_call.1} parent=1 // pred_region
      _
    $region29: #{tpu_custom_call.1} parent=1 // pred_fallthru
      _
    // Predicated region
    $region30: #{tpu_custom_call.1} parent=1 // pred_check
      _
    $region31: #{tpu_custom_call.1} parent=1 // pred_check_branch
      %73 = sbr.rel (0) target = $region33
    $region32: #{tpu_custom_call.1} parent=1 // pred_region
      %75 = dma.done [#allocation3], 64
    $region33: #{tpu_custom_call.1} parent=1 // pred_fallthru
      _
    // Predicated region
    $region34: #{tpu_custom_call.1} parent=1 // pred_check
      _
    $region35: #{tpu_custom_call.1} parent=1 // pred_check_branch
      %77 = sbr.rel (0) target = $region37
    $region36: #{tpu_custom_call.1} parent=1 // pred_region
      %79 = dma.done [#allocation6], 1024
    $region37: #{tpu_custom_call.1} parent=1 // pred_fallthru
      _
    // Predicated region
    $region38: #{tpu_custom_call.1} parent=1 // pred_check
      _
    $region39: #{tpu_custom_call.1} parent=1 // pred_check_branch
      %81 = sbr.rel (0) target = $region41
    $region40: #{tpu_custom_call.1} parent=1 // pred_region
      %83 = dma.done [#allocation6], 1024
    $region41: #{tpu_custom_call.1} parent=1 // pred_fallthru
      _
    // Predicated region
    $region42: #{tpu_custom_call.1} parent=1 // pred_check
      _
    $region43: #{tpu_custom_call.1} parent=1 // pred_check_branch
      %85 = sbr.rel (0) target = $region45
    $region44: #{tpu_custom_call.1} parent=1 // pred_region
      %87 = dma.done [#allocation9], 1024
    $region45: #{tpu_custom_call.1} parent=1 // pred_fallthru
      _
    %v88 = vld [vmem:[#allocation2] sm:$0xf]
    %v89 = vld [vmem:[#allocation5] sm:$0xf]
    %v90 = vld [vmem:[#allocation5 + $0x4] sm:$0xf]
    %v91 = vld [vmem:[#allocation5 + $0x8] sm:$0xf]
    %v92 = vld [vmem:[#allocation5 + $0xc] sm:$0xf]
    %v93 = vld [vmem:[#allocation5 + $0x10] sm:$0xf]
    %v94 = vld [vmem:[#allocation5 + $0x14] sm:$0xf]
    %v95 = vld [vmem:[#allocation5 + $0x18] sm:$0xf]
    %v96 = vld [vmem:[#allocation5 + $0x1c] sm:$0xf]
    %v97 = vld [vmem:[#allocation5 + $0x20] sm:$0xf]
    %v98 = vld [vmem:[#allocation5 + $0x24] sm:$0xf]
    %v99 = vld [vmem:[#allocation5 + $0x28] sm:$0xf]
    %v100 = vld [vmem:[#allocation5 + $0x2c] sm:$0xf]
    %v101 = vld [vmem:[#allocation5 + $0x30] sm:$0xf]
    %v102 = vld [vmem:[#allocation5 + $0x34] sm:$0xf]
    %v103 = vld [vmem:[#allocation5 + $0x38] sm:$0xf]
    %v104 = vld [vmem:[#allocation5 + $0x3c] sm:$0xf]
    %v105 = vld [vmem:[%s2] sm:$0x1]
    %v107 = vperm.slane %v105, 0
    %v125 = vunpack.c.l.b16 %v89
    %v126 = vunpack.c.l.b16 %v90
    %v127 = vunpack.c.l.b16 %v91
    %v128 = vunpack.c.l.b16 %v92
    %v129 = vunpack.c.l.b16 %v93
    %v130 = vunpack.c.l.b16 %v94
    %v131 = vunpack.c.l.b16 %v95
    %v132 = vunpack.c.l.b16 %v96
    %v133 = vunpack.c.l.b16 %v97
    %v134 = vunpack.c.l.b16 %v98
    %v135 = vunpack.c.l.b16 %v99
    %v136 = vunpack.c.l.b16 %v100
    %v137 = vunpack.c.l.b16 %v101
    %v138 = vunpack.c.l.b16 %v102
    %v139 = vunpack.c.l.b16 %v103
    %v140 = vunpack.c.l.b16 %v104
    %v141 = vpack.c.b16 %v126, %v125
    %v142 = vpack.c.b16 %v128, %v127
    %v143 = vpack.c.b16 %v130, %v129
    %v144 = vpack.c.b16 %v132, %v131
    %v145 = vpack.c.b16 %v134, %v133
    %v146 = vpack.c.b16 %v136, %v135
    %v147 = vpack.c.b16 %v138, %v137
    %v148 = vpack.c.b16 %v140, %v139
    %157 = vmatpush.bf16.msra.mxu0 %v148
    %158 = vmatpush.bf16.msra.mxu0 %v147
    %159 = vmatpush.bf16.msra.mxu0 %v146
    %160 = vmatpush.bf16.msra.mxu0 %v145
    %161 = vmatpush.bf16.msra.mxu0 %v144
    %162 = vmatpush.bf16.msra.mxu0 %v143
    %163 = vmatpush.bf16.msra.mxu0 %v142
    %164 = vmatpush.bf16.msra.mxu0 %v141
    %165 = vmatmul.bf16.gmra.mxu0 %v88
    %v166 = vpop.f32.mrf.mxu0
    %v167 = vadd.f32 %v107, %v166
    %v168 = vpop.f32.mrf.mxu0
    %169 = vdwg.mxu0
    %v170 = vtanh.pop %v167
    %v171 = vpack.c.bf16 %v170, %v170
    %v172 = vld [vmem:[#allocation7] sm:$0xf]
    %v173 = vld [vmem:[#allocation7 + $0x4] sm:$0xf]
    %v174 = vld [vmem:[#allocation7 + $0x8] sm:$0xf]
    %v175 = vld [vmem:[#allocation7 + $0xc] sm:$0xf]
    %v176 = vld [vmem:[#allocation7 + $0x10] sm:$0xf]
    %v177 = vld [vmem:[#allocation7 + $0x14] sm:$0xf]
    %v178 = vld [vmem:[#allocation7 + $0x18] sm:$0xf]
    %v179 = vld [vmem:[#allocation7 + $0x1c] sm:$0xf]
    %v180 = vld [vmem:[#allocation7 + $0x20] sm:$0xf]
    %v181 = vld [vmem:[#allocation7 + $0x24] sm:$0xf]
    %v182 = vld [vmem:[#allocation7 + $0x28] sm:$0xf]
    %v183 = vld [vmem:[#allocation7 + $0x2c] sm:$0xf]
    %v184 = vld [vmem:[#allocation7 + $0x30] sm:$0xf]
    %v185 = vld [vmem:[#allocation7 + $0x34] sm:$0xf]
    %v186 = vld [vmem:[#allocation7 + $0x38] sm:$0xf]
    %v187 = vld [vmem:[#allocation7 + $0x3c] sm:$0xf]
    %v188 = vld [vmem:[%s4] sm:$0x1]
    %v190 = vperm.slane %v188, 0
    %v208 = vunpack.c.l.b16 %v172
    %v209 = vunpack.c.l.b16 %v173
    %v210 = vunpack.c.l.b16 %v174
    %v211 = vunpack.c.l.b16 %v175
    %v212 = vunpack.c.l.b16 %v176
    %v213 = vunpack.c.l.b16 %v177
    %v214 = vunpack.c.l.b16 %v178
    %v215 = vunpack.c.l.b16 %v179
    %v216 = vunpack.c.l.b16 %v180
    %v217 = vunpack.c.l.b16 %v181
    %v218 = vunpack.c.l.b16 %v182
    %v219 = vunpack.c.l.b16 %v183
    %v220 = vunpack.c.l.b16 %v184
    %v221 = vunpack.c.l.b16 %v185
    %v222 = vunpack.c.l.b16 %v186
    %v223 = vunpack.c.l.b16 %v187
    %v224 = vpack.c.b16 %v209, %v208
    %v225 = vpack.c.b16 %v211, %v210
    %v226 = vpack.c.b16 %v213, %v212
    %v227 = vpack.c.b16 %v215, %v214
    %v228 = vpack.c.b16 %v217, %v216
    %v229 = vpack.c.b16 %v219, %v218
    %v230 = vpack.c.b16 %v221, %v220
    %v231 = vpack.c.b16 %v223, %v222
    %240 = vmatpush.bf16.msra.mxu0 %v231
    %241 = vmatpush.bf16.msra.mxu0 %v230
    %242 = vmatpush.bf16.msra.mxu0 %v229
    %243 = vmatpush.bf16.msra.mxu0 %v228
    %244 = vmatpush.bf16.msra.mxu0 %v227
    %245 = vmatpush.bf16.msra.mxu0 %v226
    %246 = vmatpush.bf16.msra.mxu0 %v225
    %247 = vmatpush.bf16.msra.mxu0 %v224
    %248 = vmatmul.bf16.gmra.mxu0 %v171
    %v249 = vpop.f32.mrf.mxu0
    %v250 = vadd.f32 %v190, %v249
    %v251 = vpop.f32.mrf.mxu0
    %252 = vdwg.mxu0
    %v253 = vtanh.pop %v250
    %v254 = vpack.c.bf16 %v253, %v253
    %v255 = vld [vmem:[#allocation8] sm:$0xf]
    %v256 = vld [vmem:[#allocation8 + $0x4] sm:$0xf]
    %v257 = vld [vmem:[#allocation8 + $0x8] sm:$0xf]
    %v258 = vld [vmem:[#allocation8 + $0xc] sm:$0xf]
    %v259 = vld [vmem:[#allocation8 + $0x10] sm:$0xf]
    %v260 = vld [vmem:[#allocation8 + $0x14] sm:$0xf]
    %v261 = vld [vmem:[#allocation8 + $0x18] sm:$0xf]
    %v262 = vld [vmem:[#allocation8 + $0x1c] sm:$0xf]
    %v263 = vld [vmem:[#allocation8 + $0x20] sm:$0xf]
    %v264 = vld [vmem:[#allocation8 + $0x24] sm:$0xf]
    %v265 = vld [vmem:[#allocation8 + $0x28] sm:$0xf]
    %v266 = vld [vmem:[#allocation8 + $0x2c] sm:$0xf]
    %v267 = vld [vmem:[#allocation8 + $0x30] sm:$0xf]
    %v268 = vld [vmem:[#allocation8 + $0x34] sm:$0xf]
    %v269 = vld [vmem:[#allocation8 + $0x38] sm:$0xf]
    %v270 = vld [vmem:[#allocation8 + $0x3c] sm:$0xf]
    %v271 = vld [vmem:[%s6] sm:$0x1]
    %v273 = vperm.slane %v271, 0
    %v291 = vunpack.c.l.b16 %v255
    %v292 = vunpack.c.l.b16 %v256
    %v293 = vunpack.c.l.b16 %v257
    %v294 = vunpack.c.l.b16 %v258
    %v295 = vunpack.c.l.b16 %v259
    %v296 = vunpack.c.l.b16 %v260
    %v297 = vunpack.c.l.b16 %v261
    %v298 = vunpack.c.l.b16 %v262
    %v299 = vunpack.c.l.b16 %v263
    %v300 = vunpack.c.l.b16 %v264
    %v301 = vunpack.c.l.b16 %v265
    %v302 = vunpack.c.l.b16 %v266
    %v303 = vunpack.c.l.b16 %v267
    %v304 = vunpack.c.l.b16 %v268
    %v305 = vunpack.c.l.b16 %v269
    %v306 = vunpack.c.l.b16 %v270
    %v307 = vpack.c.b16 %v292, %v291
    %v308 = vpack.c.b16 %v294, %v293
    %v309 = vpack.c.b16 %v296, %v295
    %v310 = vpack.c.b16 %v298, %v297
    %v311 = vpack.c.b16 %v300, %v299
    %v312 = vpack.c.b16 %v302, %v301
    %v313 = vpack.c.b16 %v304, %v303
    %v314 = vpack.c.b16 %v306, %v305
    %323 = vmatpush.bf16.msra.mxu0 %v314
    %324 = vmatpush.bf16.msra.mxu0 %v313
    %325 = vmatpush.bf16.msra.mxu0 %v312
    %326 = vmatpush.bf16.msra.mxu0 %v311
    %327 = vmatpush.bf16.msra.mxu0 %v310
    %328 = vmatpush.bf16.msra.mxu0 %v309
    %329 = vmatpush.bf16.msra.mxu0 %v308
    %330 = vmatpush.bf16.msra.mxu0 %v307
    %331 = vmatmul.bf16.gmra.mxu0 %v254
    %v332 = vpop.f32.mrf.mxu0
    %v333 = vadd.f32 %v273, %v332
    %v334 = vpop.f32.mrf.mxu0
    %335 = vdwg.mxu0
    %336 = vst [vmem:[#allocation10] sm:$0xff] %v333
    // Predicated region
    $region46: #{tpu_custom_call.1} parent=1 // pred_check
      _
    $region47: #{tpu_custom_call.1} parent=1 // pred_check_branch
      %338 = sbr.rel (0) target = $region49
    $region48: #{tpu_custom_call.1} parent=1 // pred_region
      %340 = vsyncadd [#allocation4], 0
      %s342 = sshll.u32 [#allocation10], 4
      %s343 = int_to_ptr.vmem [resolvable:$true] %s342
      %s344 = sshll.u32 %s7, 4
      %s345 = int_to_ptr.hbm [resolvable:$true] %s344
      %347 = dma.vmem_to_hbm [thread:$0]  %s343, 128, %s345, [#allocation4]
    $region49: #{tpu_custom_call.1} parent=1 // pred_fallthru
      _
    // Predicated region
    $region50: #{tpu_custom_call.1} parent=1 // pred_check
      _
    $region51: #{tpu_custom_call.1} parent=1 // pred_check_branch
      %349 = sbr.rel (0) target = $region53
    $region52: #{tpu_custom_call.1} parent=1 // pred_region
      %351 = dma.done [#allocation4], 128
    $region53: #{tpu_custom_call.1} parent=1 // pred_fallthru
      _
    %352 = vsyncpa [#allocation3], 1
    %353 = vsyncpa [#allocation6], 1
    %354 = vsyncpa [#allocation9], 1
    %355 = vsyncpa [#allocation4], 1

// kernel: tpu_custom_call.1
$region0: #{tpu_custom_call.1}
  #allocation0 [shape = 'u32[]', space=smem, size = 0x4, offset = 0x4, fixed_abs, tag = 'smem constant byte address 0x4 - core index']
  #allocation1 [shape = 'u32[72,128]{1,0:T(1,128)}', space=vmem, size = 0x9000, scoped, tag = 'internal scratch']
  %s0 = inlined_call_operand.hbm [shape: bf16[8,128], index: 0, kind: input, shape index: {}]
  %s1 = inlined_call_operand.hbm [shape: bf16[128,128], index: 1, kind: input, shape index: {}]
  %s2 = inlined_call_operand.vmem [shape: f32[1,128], index: 2, kind: input, shape index: {}]
  %s3 = inlined_call_operand.hbm [shape: bf16[128,128], index: 3, kind: input, shape index: {}]
  %s4 = inlined_call_operand.vmem [shape: f32[1,128], index: 4, kind: input, shape index: {}]
  %s5 = inlined_call_operand.hbm [shape: bf16[128,128], index: 5, kind: input, shape index: {}]
  %s6 = inlined_call_operand.vmem [shape: f32[1,128], index: 6, kind: input, shape index: {}]
  %s7 = inlined_call_operand.hbm [shape: f32[8,128], index: 7, kind: output, shape index: {}]
  %s8 = sld [smem:[#allocation0]]
  $region54: #{tpu_custom_call.1} parent=0
    _
  %s10 = ssub.s32 1, %s8
  %s11 = scalar_select 0, %s10, %s8
  $region1: #{tpu_custom_call.1} parent=0
    #allocation2 [shape = 'u8[2048]{0}', space=vmem, size = 0x800, scoped, tag = 'input window, operand 0, single buffered']
    #allocation3 [shape = 's32[1]{0}', space=sflag, size = 0x4, scoped, tag = 'scoped memory for tpu_custom_call.1']
    #allocation4 [shape = 's32[1]{0}', space=sflag, size = 0x4, scoped, tag = 'scoped memory for tpu_custom_call.1']
    #allocation5 [shape = 'u8[32768]{0}', space=vmem, size = 0x8000, scoped, tag = 'input window, operand 1, single buffered']
    #allocation6 [shape = 's32[1]{0}', space=sflag, size = 0x4, scoped, tag = 'scoped memory for tpu_custom_call.1']
    #allocation7 [shape = 'u8[32768]{0}', space=vmem, size = 0x8000, scoped, tag = 'input window, operand 3, single buffered']
    #allocation8 [shape = 'u8[32768]{0}', space=vmem, size = 0x8000, scoped, tag = 'input window, operand 5, single buffered']
    #allocation9 [shape = 's32[1]{0}', space=sflag, size = 0x4, scoped, tag = 'scoped memory for tpu_custom_call.1']
    #allocation10 [shape = 'u8[4096]{0}', space=vmem, size = 0x1000, scoped, tag = 'output window, operand 0, single buffered']
    %12 = vsyncpa [#allocation3], 0
    %13 = vsyncpa [#allocation6], 0
    %14 = vsyncpa [#allocation9], 0
    %15 = vsyncpa [#allocation4], 0
    // Predicated region
    $region2: #{tpu_custom_call.1} parent=1 // pred_check
      _
    $region3: #{tpu_custom_call.1} parent=1 // pred_check_branch
      %17 = sbr.rel (0) target = $region5
    $region4: #{tpu_custom_call.1} parent=1 // pred_region
      %19 = vsyncadd [#allocation3], 0
      %s21 = sshll.u32 %s0, 4
      %s22 = int_to_ptr.hbm [resolvable:$true] %s21
      %s23 = sshll.u32 [#allocation2], 4
      %s24 = int_to_ptr.vmem [resolvable:$true] %s23
      %26 = dma.hbm_to_vmem [thread:$0]  %s22, 64, %s24, [#allocation3]
    $region5: #{tpu_custom_call.1} parent=1 // pred_fallthru
      _
    // Predicated region
    $region6: #{tpu_custom_call.1} parent=1 // pred_check
      _
    $region7: #{tpu_custom_call.1} parent=1 // pred_check_branch
      %28 = sbr.rel (0) target = $region9
    $region8: #{tpu_custom_call.1} parent=1 // pred_region
      %30 = vsyncadd [#allocation6], 0
      %s31 = sshll.u32 %s1, 4
      %s32 = int_to_ptr.hbm [resolvable:$true] %s31
      %s33 = sshll.u32 [#allocation5], 4
      %s34 = int_to_ptr.vmem [resolvable:$true] %s33
      %39 = dma.hbm_to_vmem [thread:$0]  %s32, 1024, %s34, [#allocation6], 64, 64, 4
    $region9: #{tpu_custom_call.1} parent=1 // pred_fallthru
      _
    // Predicated region
    $region10: #{tpu_custom_call.1} parent=1 // pred_check
      _
    $region11: #{tpu_custom_call.1} parent=1 // pred_check_branch
      %41 = sbr.rel (0) target = $region13
    $region12: #{tpu_custom_call.1} parent=1 // pred_region
      _
    $region13: #{tpu_custom_call.1} parent=1 // pred_fallthru
      _
    // Predicated region
    $region14: #{tpu_custom_call.1} parent=1 // pred_check
      _
    $region15: #{tpu_custom_call.1} parent=1 // pred_check_branch
      %43 = sbr.rel (0) target = $region17
    $region16: #{tpu_custom_call.1} parent=1 // pred_region
      %45 = vsyncadd [#allocation6], 0
      %s46 = sshll.u32 %s3, 4
      %s47 = int_to_ptr.hbm [resolvable:$true] %s46
      %s48 = sshll.u32 [#allocation7], 4
      %s49 = int_to_ptr.vmem [resolvable:$true] %s48
      %54 = dma.hbm_to_vmem [thread:$0]  %s47, 1024, %s49, [#allocation6], 64, 64, 4
    $region17: #{tpu_custom_call.1} parent=1 // pred_fallthru
      _
    // Predicated region
    $region18: #{tpu_custom_call.1} parent=1 // pred_check
      _
    $region19: #{tpu_custom_call.1} parent=1 // pred_check_branch
      %56 = sbr.rel (0) target = $region21
    $region20: #{tpu_custom_call.1} parent=1 // pred_region
      _
    $region21: #{tpu_custom_call.1} parent=1 // pred_fallthru
      _
    // Predicated region
    $region22: #{tpu_custom_call.1} parent=1 // pred_check
      _
    $region23: #{tpu_custom_call.1} parent=1 // pred_check_branch
      %58 = sbr.rel (0) target = $region25
    $region24: #{tpu_custom_call.1} parent=1 // pred_region
      %60 = vsyncadd [#allocation9], 0
      %s61 = sshll.u32 %s5, 4
      %s62 = int_to_ptr.hbm [resolvable:$true] %s61
      %s63 = sshll.u32 [#allocation8], 4
      %s64 = int_to_ptr.vmem [resolvable:$true] %s63
      %69 = dma.hbm_to_vmem [thread:$0]  %s62, 1024, %s64, [#allocation9], 64, 64, 4
    $region25: #{tpu_custom_call.1} parent=1 // pred_fallthru
      _
    // Predicated region
    $region26: #{tpu_custom_call.1} parent=1 // pred_check
      _
    $region27: #{tpu_custom_call.1} parent=1 // pred_check_branch
      %71 = sbr.rel (0) target = $region29
    $region28: #{tpu_custom_call.1} parent=1 // pred_region
      _
    $region29: #{tpu_custom_call.1} parent=1 // pred_fallthru
      _
    // Predicated region
    $region30: #{tpu_custom_call.1} parent=1 // pred_check
      _
    $region31: #{tpu_custom_call.1} parent=1 // pred_check_branch
      %73 = sbr.rel (0) target = $region33
    $region32: #{tpu_custom_call.1} parent=1 // pred_region
      %75 = dma.done [#allocation3], 64
    $region33: #{tpu_custom_call.1} parent=1 // pred_fallthru
      _
    // Predicated region
    $region34: #{tpu_custom_call.1} parent=1 // pred_check
      _
    $region35: #{tpu_custom_call.1} parent=1 // pred_check_branch
      %77 = sbr.rel (0) target = $region37
    $region36: #{tpu_custom_call.1} parent=1 // pred_region
      %79 = dma.done [#allocation6], 1024
    $region37: #{tpu_custom_call.1} parent=1 // pred_fallthru
      _
    // Predicated region
    $region38: #{tpu_custom_call.1} parent=1 // pred_check
      _
    $region39: #{tpu_custom_call.1} parent=1 // pred_check_branch
      %81 = sbr.rel (0) target = $region41
    $region40: #{tpu_custom_call.1} parent=1 // pred_region
      %83 = dma.done [#allocation6], 1024
    $region41: #{tpu_custom_call.1} parent=1 // pred_fallthru
      _
    // Predicated region
    $region42: #{tpu_custom_call.1} parent=1 // pred_check
      _
    $region43: #{tpu_custom_call.1} parent=1 // pred_check_branch
      %85 = sbr.rel (0) target = $region45
    $region44: #{tpu_custom_call.1} parent=1 // pred_region
      %87 = dma.done [#allocation9], 1024
    $region45: #{tpu_custom_call.1} parent=1 // pred_fallthru
      _
    %v88 = vld [vmem:[#allocation2] sm:$0xf]
    %v89 = vld [vmem:[#allocation5] sm:$0xf]
    %v90 = vld [vmem:[#allocation5 + $0x4] sm:$0xf]
    %v91 = vld [vmem:[#allocation5 + $0x8] sm:$0xf]
    %v92 = vld [vmem:[#allocation5 + $0xc] sm:$0xf]
    %v93 = vld [vmem:[#allocation5 + $0x10] sm:$0xf]
    %v94 = vld [vmem:[#allocation5 + $0x14] sm:$0xf]
    %v95 = vld [vmem:[#allocation5 + $0x18] sm:$0xf]
    %v96 = vld [vmem:[#allocation5 + $0x1c] sm:$0xf]
    %v97 = vld [vmem:[#allocation5 + $0x20] sm:$0xf]
    %v98 = vld [vmem:[#allocation5 + $0x24] sm:$0xf]
    %v99 = vld [vmem:[#allocation5 + $0x28] sm:$0xf]
    %v100 = vld [vmem:[#allocation5 + $0x2c] sm:$0xf]
    %v101 = vld [vmem:[#allocation5 + $0x30] sm:$0xf]
    %v102 = vld [vmem:[#allocation5 + $0x34] sm:$0xf]
    %v103 = vld [vmem:[#allocation5 + $0x38] sm:$0xf]
    %v104 = vld [vmem:[#allocation5 + $0x3c] sm:$0xf]
    %v105 = vld [vmem:[%s2] sm:$0x1]
    %v107 = vperm.slane %v105, 0
    %v125 = vunpack.c.l.b16 %v89
    %v126 = vunpack.c.l.b16 %v90
    %v127 = vunpack.c.l.b16 %v91
    %v128 = vunpack.c.l.b16 %v92
    %v129 = vunpack.c.l.b16 %v93
    %v130 = vunpack.c.l.b16 %v94
    %v131 = vunpack.c.l.b16 %v95
    %v132 = vunpack.c.l.b16 %v96
    %v133 = vunpack.c.l.b16 %v97
    %v134 = vunpack.c.l.b16 %v98
    %v135 = vunpack.c.l.b16 %v99
    %v136 = vunpack.c.l.b16 %v100
    %v137 = vunpack.c.l.b16 %v101
    %v138 = vunpack.c.l.b16 %v102
    %v139 = vunpack.c.l.b16 %v103
    %v140 = vunpack.c.l.b16 %v104
    %v141 = vpack.c.b16 %v126, %v125
    %v142 = vpack.c.b16 %v128, %v127
    %v143 = vpack.c.b16 %v130, %v129
    %v144 = vpack.c.b16 %v132, %v131
    %v145 = vpack.c.b16 %v134, %v133
    %v146 = vpack.c.b16 %v136, %v135
    %v147 = vpack.c.b16 %v138, %v137
    %v148 = vpack.c.b16 %v140, %v139
    %157 = vmatpush.bf16.msra.mxu0 %v148
    %158 = vmatpush.bf16.msra.mxu0 %v147
    %159 = vmatpush.bf16.msra.mxu0 %v146
    %160 = vmatpush.bf16.msra.mxu0 %v145
    %161 = vmatpush.bf16.msra.mxu0 %v144
    %162 = vmatpush.bf16.msra.mxu0 %v143
    %163 = vmatpush.bf16.msra.mxu0 %v142
    %164 = vmatpush.bf16.msra.mxu0 %v141
    %165 = vmatmul.bf16.gmra.mxu0 %v88
    %v166 = vpop.f32.mrf.mxu0
    %v167 = vadd.f32 %v107, %v166
    %v168 = vpop.f32.mrf.mxu0
    %169 = vdwg.mxu0
    %v170 = vtanh.pop %v167
    %v171 = vpack.c.bf16 %v170, %v170
    %v172 = vld [vmem:[#allocation7] sm:$0xf]
    %v173 = vld [vmem:[#allocation7 + $0x4] sm:$0xf]
    %v174 = vld [vmem:[#allocation7 + $0x8] sm:$0xf]
    %v175 = vld [vmem:[#allocation7 + $0xc] sm:$0xf]
    %v176 = vld [vmem:[#allocation7 + $0x10] sm:$0xf]
    %v177 = vld [vmem:[#allocation7 + $0x14] sm:$0xf]
    %v178 = vld [vmem:[#allocation7 + $0x18] sm:$0xf]
    %v179 = vld [vmem:[#allocation7 + $0x1c] sm:$0xf]
    %v180 = vld [vmem:[#allocation7 + $0x20] sm:$0xf]
    %v181 = vld [vmem:[#allocation7 + $0x24] sm:$0xf]
    %v182 = vld [vmem:[#allocation7 + $0x28] sm:$0xf]
    %v183 = vld [vmem:[#allocation7 + $0x2c] sm:$0xf]
    %v184 = vld [vmem:[#allocation7 + $0x30] sm:$0xf]
    %v185 = vld [vmem:[#allocation7 + $0x34] sm:$0xf]
    %v186 = vld [vmem:[#allocation7 + $0x38] sm:$0xf]
    %v187 = vld [vmem:[#allocation7 + $0x3c] sm:$0xf]
    %v188 = vld [vmem:[%s4] sm:$0x1]
    %v190 = vperm.slane %v188, 0
    %v208 = vunpack.c.l.b16 %v172
    %v209 = vunpack.c.l.b16 %v173
    %v210 = vunpack.c.l.b16 %v174
    %v211 = vunpack.c.l.b16 %v175
    %v212 = vunpack.c.l.b16 %v176
    %v213 = vunpack.c.l.b16 %v177
    %v214 = vunpack.c.l.b16 %v178
    %v215 = vunpack.c.l.b16 %v179
    %v216 = vunpack.c.l.b16 %v180
    %v217 = vunpack.c.l.b16 %v181
    %v218 = vunpack.c.l.b16 %v182
    %v219 = vunpack.c.l.b16 %v183
    %v220 = vunpack.c.l.b16 %v184
    %v221 = vunpack.c.l.b16 %v185
    %v222 = vunpack.c.l.b16 %v186
    %v223 = vunpack.c.l.b16 %v187
    %v224 = vpack.c.b16 %v209, %v208
    %v225 = vpack.c.b16 %v211, %v210
    %v226 = vpack.c.b16 %v213, %v212
    %v227 = vpack.c.b16 %v215, %v214
    %v228 = vpack.c.b16 %v217, %v216
    %v229 = vpack.c.b16 %v219, %v218
    %v230 = vpack.c.b16 %v221, %v220
    %v231 = vpack.c.b16 %v223, %v222
    %240 = vmatpush.bf16.msra.mxu0 %v231
    %241 = vmatpush.bf16.msra.mxu0 %v230
    %242 = vmatpush.bf16.msra.mxu0 %v229
    %243 = vmatpush.bf16.msra.mxu0 %v228
    %244 = vmatpush.bf16.msra.mxu0 %v227
    %245 = vmatpush.bf16.msra.mxu0 %v226
    %246 = vmatpush.bf16.msra.mxu0 %v225
    %247 = vmatpush.bf16.msra.mxu0 %v224
    %248 = vmatmul.bf16.gmra.mxu0 %v171
    %v249 = vpop.f32.mrf.mxu0
    %v250 = vadd.f32 %v190, %v249
    %v251 = vpop.f32.mrf.mxu0
    %252 = vdwg.mxu0
    %v253 = vtanh.pop %v250
    %v254 = vpack.c.bf16 %v253, %v253
    %v255 = vld [vmem:[#allocation8] sm:$0xf]
    %v256 = vld [vmem:[#allocation8 + $0x4] sm:$0xf]
    %v257 = vld [vmem:[#allocation8 + $0x8] sm:$0xf]
    %v258 = vld [vmem:[#allocation8 + $0xc] sm:$0xf]
    %v259 = vld [vmem:[#allocation8 + $0x10] sm:$0xf]
    %v260 = vld [vmem:[#allocation8 + $0x14] sm:$0xf]
    %v261 = vld [vmem:[#allocation8 + $0x18] sm:$0xf]
    %v262 = vld [vmem:[#allocation8 + $0x1c] sm:$0xf]
    %v263 = vld [vmem:[#allocation8 + $0x20] sm:$0xf]
    %v264 = vld [vmem:[#allocation8 + $0x24] sm:$0xf]
    %v265 = vld [vmem:[#allocation8 + $0x28] sm:$0xf]
    %v266 = vld [vmem:[#allocation8 + $0x2c] sm:$0xf]
    %v267 = vld [vmem:[#allocation8 + $0x30] sm:$0xf]
    %v268 = vld [vmem:[#allocation8 + $0x34] sm:$0xf]
    %v269 = vld [vmem:[#allocation8 + $0x38] sm:$0xf]
    %v270 = vld [vmem:[#allocation8 + $0x3c] sm:$0xf]
    %v271 = vld [vmem:[%s6] sm:$0x1]
    %v273 = vperm.slane %v271, 0
    %v291 = vunpack.c.l.b16 %v255
    %v292 = vunpack.c.l.b16 %v256
    %v293 = vunpack.c.l.b16 %v257
    %v294 = vunpack.c.l.b16 %v258
    %v295 = vunpack.c.l.b16 %v259
    %v296 = vunpack.c.l.b16 %v260
    %v297 = vunpack.c.l.b16 %v261
    %v298 = vunpack.c.l.b16 %v262
    %v299 = vunpack.c.l.b16 %v263
    %v300 = vunpack.c.l.b16 %v264
    %v301 = vunpack.c.l.b16 %v265
    %v302 = vunpack.c.l.b16 %v266
    %v303 = vunpack.c.l.b16 %v267
    %v304 = vunpack.c.l.b16 %v268
    %v305 = vunpack.c.l.b16 %v269
    %v306 = vunpack.c.l.b16 %v270
    %v307 = vpack.c.b16 %v292, %v291
    %v308 = vpack.c.b16 %v294, %v293
    %v309 = vpack.c.b16 %v296, %v295
    %v310 = vpack.c.b16 %v298, %v297
    %v311 = vpack.c.b16 %v300, %v299
    %v312 = vpack.c.b16 %v302, %v301
    %v313 = vpack.c.b16 %v304, %v303
    %v314 = vpack.c.b16 %v306, %v305
    %323 = vmatpush.bf16.msra.mxu0 %v314
    %324 = vmatpush.bf16.msra.mxu0 %v313
    %325 = vmatpush.bf16.msra.mxu0 %v312
    %326 = vmatpush.bf16.msra.mxu0 %v311
    %327 = vmatpush.bf16.msra.mxu0 %v310
    %328 = vmatpush.bf16.msra.mxu0 %v309
    %329 = vmatpush.bf16.msra.mxu0 %v308
    %330 = vmatpush.bf16.msra.mxu0 %v307
    %331 = vmatmul.bf16.gmra.mxu0 %v254
    %v332 = vpop.f32.mrf.mxu0
    %v333 = vadd.f32 %v273, %v332
    %v334 = vpop.f32.mrf.mxu0
    %335 = vdwg.mxu0
    %336 = vst [vmem:[#allocation10] sm:$0xff] %v333
    // Predicated region
    $region46: #{tpu_custom_call.1} parent=1 // pred_check
      _
    $region47: #{tpu_custom_call.1} parent=1 // pred_check_branch
      %338 = sbr.rel (0) target = $region49
    $region48: #{tpu_custom_call.1} parent=1 // pred_region
      %340 = vsyncadd [#allocation4], 0
      %s342 = sshll.u32 [#allocation10], 4
      %s343 = int_to_ptr.vmem [resolvable:$true] %s342
      %s344 = sshll.u32 %s7, 4
      %s345 = int_to_ptr.hbm [resolvable:$true] %s344
      %347 = dma.vmem_to_hbm [thread:$0]  %s343, 128, %s345, [#allocation4]
    $region49: #{tpu_custom_call.1} parent=1 // pred_fallthru
      _
    // Predicated region
    $region50: #{tpu_custom_call.1} parent=1 // pred_check
      _
    $region51: #{tpu_custom_call.1} parent=1 // pred_check_branch
      %349 = sbr.rel (0) target = $region53
    $region52: #{tpu_custom_call.1} parent=1 // pred_region
      %351 = dma.done [#allocation4], 128
    $region53: #{tpu_custom_call.1} parent=1 // pred_fallthru
      _
    %352 = vsyncpa [#allocation3], 1
    %353 = vsyncpa [#allocation6], 1
    %354 = vsyncpa [#allocation9], 1
    %355 = vsyncpa [#allocation4], 1

</llo_original>
